<compile_context>
chip_gen: v7x
topology: tpu7x:2x2x1
jax: 0.10.0
libtpu: 0.0.40
codegen_flags: <defaults>
</compile_context>

<pallas_src>
import math

import jax
import jax.numpy as jnp
from jax.experimental import pallas as pl
from jax.experimental.pallas import tpu as pltpu


# -----------------------------------------------------------------------------
# Kernel
# -----------------------------------------------------------------------------
def res_graph_conv_kernel(x_ref, a1_ref, a2_ref, w1_ref, ss1_ref,
                          w2_ref, ss2_ref, o_ref):
    tb, J, _ = a1_ref.shape
    R = tb * J
    cin = x_ref.shape[1] - 2              # last 2 lanes carry diag attention

    slab = x_ref[...]                     # (R, Cin+2) bf16, rows = (batch, joint)
    h = slab[:, :cin]                     # (R, Cin) bf16
    d1 = slab[:, cin:cin + 1]             # (R, 1) diag(A1)[joint]
    d2 = slab[:, cin + 1:cin + 2]         # (R, 1) diag(A2)[joint]

    def layer(hin, dcol, a_off, w_cat, ss):
        """out = (d*h)@Wa + (A_off@h)@Wb, fused as one K=2*Cin MXU matmul."""
        c = hin.shape[1]
        hd = dcol * hin                                            # VPU, bf16
        # per-batch node mix against the raw (J, J) off-diagonal adjacency
        hm = jnp.einsum("bjk,bkc->bjc", a_off, hin.reshape(tb, J, c),
                        preferred_element_type=jnp.float32)
        hm = hm.reshape(R, c).astype(jnp.bfloat16)
        lhs = jnp.concatenate([hd, hm], axis=1)                    # (R, 2c) bf16
        out = jnp.dot(lhs, w_cat, preferred_element_type=jnp.float32)
        out = out * ss[0:1, :] + ss[1:2, :]                        # bias+BN fold, f32
        return jnp.maximum(out, 0.0)                               # ReLU

    o1 = layer(h, d1, a1_ref[...], w1_ref[...], ss1_ref[...])
    o2 = layer(o1.astype(jnp.bfloat16), d2, a2_ref[...], w2_ref[...], ss2_ref[...])
    # TODO(synk): output lane dim Cout=32 (<128) -> masked stores; left as-is since a
    #             lane-dense relayout would require an in-kernel lane<->sublane reshuffle.
    o_ref[...] = h.astype(jnp.float32) + o2                        # residual, f32


# -----------------------------------------------------------------------------
# Wrapper
# -----------------------------------------------------------------------------
def _masked_softmax(adj, e):
    a = adj * e + (1.0 - adj) * (-9e15)
    return jax.nn.softmax(a, axis=1)


def _fold_affine(bias, gamma, beta, mean, var, eps=1e-5):
    scale = gamma * jax.lax.rsqrt(var + eps)
    shift = (bias - mean) * scale + beta
    return jnp.stack([scale.reshape(-1), shift.reshape(-1)], axis=0)   # (2, C) f32


def res_graph_conv(x, adj, params, rows_per_step=4096):
    """x: (B, J, C) f32. adj: (J, J) 0/1 float. params: dict (see init_params)."""
    B, J, C = x.shape
    H = params["w1a"].shape[1]
    Cout = params["w2a"].shape[1]
    assert Cout == C, "residual add requires input_dim == output_dim"
    # J is assumed a multiple of the bf16 sublane tile (16) so the in-kernel
    # (R, C) <-> (tb, J, C) reshapes are pure regroupings (true for SemGCN J=16).

    # ---- batch tile: tb batch elements (R = tb*J rows) per grid step --------
    need = 16 // math.gcd(J, 16)            # keep R % 16 == 0 for bf16 tiling
    tb = max(1, min(rows_per_step // J, B))
    tb = max(need, (tb // need) * need)
    # v7x has 2 TensorCores: ensure the "parallel" grid has >= 2 steps if possible.
    if B > need and pl.cdiv(B, tb) < 2:
        tb = max(need, (pl.cdiv(B, 2) // need) * need)
    Bp = pl.cdiv(B, tb) * tb
    R = tb * J

    # ---- batch-invariant precompute (plain XLA, runs once) ------------------
    def prep(e_key):
        a = _masked_softmax(adj, params[e_key])
        return jnp.diagonal(a), a * (1.0 - jnp.eye(J, dtype=a.dtype))

    diag1, off1 = prep("e1")
    diag2, off2 = prep("e2")

    xp = x if Bp == B else jnp.pad(x, ((0, Bp - B), (0, 0), (0, 0)))
    x2d = xp.reshape(Bp * J, C)
    # diag attention of both layers rides as 2 extra lanes of the bf16 slab
    dcols = jnp.stack([jnp.tile(diag1, Bp), jnp.tile(diag2, Bp)], axis=1)
    slab = jnp.concatenate([x2d, dcols], axis=1).astype(jnp.bfloat16)  # (Bp*J, C+2)

    # off-diagonal node-mix matrices, pre-broadcast over the batch tile (tiny)
    a1b = jnp.broadcast_to(off1.astype(jnp.bfloat16), (tb, J, J))
    a2b = jnp.broadcast_to(off2.astype(jnp.bfloat16), (tb, J, J))

    # fused channel weights for the K-concatenated matmul: vstack([Wa, Wb])
    w1cat = jnp.concatenate([params["w1a"], params["w1b"]], axis=0).astype(jnp.bfloat16)
    w2cat = jnp.concatenate([params["w2a"], params["w2b"]], axis=0).astype(jnp.bfloat16)

    ss1 = _fold_affine(params["b1"], params["g1"], params["bt1"],
                       params["m1"], params["v1"])                  # (2, H) f32
    ss2 = _fold_affine(params["b2"], params["g2"], params["bt2"],
                       params["m2"], params["v2"])                  # (2, Cout) f32

    flops_per_elem = (2 * J * J * C + 4 * J * C * H +
                      2 * J * J * H + 4 * J * H * Cout)
    cost = pl.CostEstimate(
        flops=Bp * flops_per_elem,
        transcendentals=0,
        bytes_accessed=int(slab.size) * 2 + Bp * J * Cout * 4)

    def const_spec(shape):
        return pl.BlockSpec(shape, lambda t: (0,) * len(shape))

    out2d = pl.pallas_call(
        res_graph_conv_kernel,
        out_shape=jax.ShapeDtypeStruct((Bp * J, Cout), jnp.float32),
        grid=(Bp // tb,),
        in_specs=[
            pl.BlockSpec((R, C + 2), lambda t: (t, 0)),            # x slab (+diag lanes)
            const_spec((tb, J, J)), const_spec((tb, J, J)),        # A_off layer 1 / 2
            const_spec((2 * C, H)), const_spec((2, H)),            # layer-1 W / affine
            const_spec((2 * H, Cout)), const_spec((2, Cout)),      # layer-2 W / affine
        ],
        out_specs=pl.BlockSpec((R, Cout), lambda t: (t, 0)),
        compiler_params=pltpu.CompilerParams(
            dimension_semantics=("parallel",),
            vmem_limit_bytes=32 * 1024 * 1024),
        cost_estimate=cost,
    )(slab, a1b, a2b, w1cat, ss1, w2cat, ss2)

    out = out2d.reshape(Bp, J, Cout)
    return out[:B] if Bp != B else out


# -----------------------------------------------------------------------------
# Deterministic parameter init (mirrors the PyTorch __init__ shapes)
# -----------------------------------------------------------------------------
def init_params(key, in_dim, hid_dim, out_dim, J):
    def xavier(key, fan_in, fan_out, shape, gain=1.414):
        bound = gain * math.sqrt(6.0 / (fan_in + fan_out))
        return jax.random.uniform(key, shape, jnp.float32, -bound, bound)

    ks = jax.random.split(key, 6)
    stdv1 = 1.0 / math.sqrt(hid_dim)
    stdv2 = 1.0 / math.sqrt(out_dim)
    return {
        # layer 1: SemGraphConv(in_dim -> hid_dim)
        "w1a": xavier(ks[0], in_dim, hid_dim, (in_dim, hid_dim)),
        "w1b": xavier(ks[1], in_dim, hid_dim, (in_dim, hid_dim)),
        "b1": jax.random.uniform(ks[2], (1, hid_dim), jnp.float32, -stdv1, stdv1),
        "e1": jnp.ones((J, J), jnp.float32),
        "g1": jnp.ones((1, hid_dim), jnp.float32),
        "bt1": jnp.zeros((1, hid_dim), jnp.float32),
        "m1": jnp.zeros((1, hid_dim), jnp.float32),
        "v1": jnp.ones((1, hid_dim), jnp.float32),
        # layer 2: SemGraphConv(hid_dim -> out_dim)
        "w2a": xavier(ks[3], hid_dim, out_dim, (hid_dim, out_dim)),
        "w2b": xavier(ks[4], hid_dim, out_dim, (hid_dim, out_dim)),
        "b2": jax.random.uniform(ks[5], (1, out_dim), jnp.float32, -stdv2, stdv2),
        "e2": jnp.ones((J, J), jnp.float32),
        "g2": jnp.ones((1, out_dim), jnp.float32),
        "bt2": jnp.zeros((1, out_dim), jnp.float32),
        "m2": jnp.zeros((1, out_dim), jnp.float32),
        "v2": jnp.ones((1, out_dim), jnp.float32),
    }


def make_chain_adj(J):
    """Deterministic adjacency: chain graph with self-loops (float 0/1)."""
    a = jnp.eye(J, dtype=jnp.float32)
    off = jnp.eye(J, k=1, dtype=jnp.float32) + jnp.eye(J, k=-1, dtype=jnp.float32)
    return jnp.clip(a + off, 0.0, 1.0)


# -----------------------------------------------------------------------------
# Pure-JAX reference (original unfused math, f32) for a sanity check
# -----------------------------------------------------------------------------
def reference(x, adj, params):
    def layer(x, wa, wb, bias, e, gamma, beta, mean, var):
        h0 = jnp.einsum("bjc,cd->bjd", x, wa)
        h1 = jnp.einsum("bjc,cd->bjd", x, wb)
        a = adj * e + (1.0 - adj) * (-9e15)
        a = jax.nn.softmax(a, axis=1)
        eye = jnp.eye(adj.shape[0], dtype=jnp.float32)
        out = jnp.einsum("jk,bkd->bjd", a * eye, h0)
        out = out + jnp.einsum("jk,bkd->bjd", a * (1.0 - eye), h1)
        out = out + bias[None]
        out = (out - mean[None]) * (gamma[None] * jax.lax.rsqrt(var[None] + 1e-5)) + beta[None]
        return jnp.maximum(out, 0.0)

    o1 = layer(x, params["w1a"], params["w1b"], params["b1"], params["e1"],
               params["g1"], params["bt1"], params["m1"], params["v1"])
    o2 = layer(o1, params["w2a"], params["w2b"], params["b2"], params["e2"],
               params["g2"], params["bt2"], params["m2"], params["v2"])
    return x + o2


if __name__ == "__main__":
    B, J = 2, 16                   # batch, graph nodes (skeleton joints)
    in_dim = out_dim = 32          # residual add requires input_dim == output_dim
    hid_dim = 32

    key = jax.random.PRNGKey(0)
    kx, kp = jax.random.split(key)
    x = jax.random.normal(kx, (B, J, in_dim), jnp.float32)
    adj = make_chain_adj(J)
    params = init_params(kp, in_dim, hid_dim, out_dim, J)

    out = jax.block_until_ready(res_graph_conv(x, adj, params))
    ref = reference(x, adj, params)

    assert out.shape == (B, J, out_dim)
    # bf16 MXU operands -> tolerance loosened vs the pure-f32 reference
    err = float(jnp.max(jnp.abs(out - ref)))
    assert jnp.allclose(out, ref, rtol=5e-2, atol=5e-2), err

    print("KERNEL_OK")
</pallas_src>

<mosaic_0001>
module attributes {stable_mosaic.version = 11 : i64} {
  func.func @res_graph_conv_kernel(%arg0: i32, %arg1: memref<16x34xbf16, #tpu.memory_space<vmem>>, %arg2: memref<1x16x16xbf16, #tpu.memory_space<vmem>>, %arg3: memref<1x16x16xbf16, #tpu.memory_space<vmem>>, %arg4: memref<64x32xbf16, #tpu.memory_space<vmem>>, %arg5: memref<2x32xf32, #tpu.memory_space<vmem>>, %arg6: memref<64x32xbf16, #tpu.memory_space<vmem>>, %arg7: memref<2x32xf32, #tpu.memory_space<vmem>>, %arg8: memref<16x32xf32, #tpu.memory_space<vmem>>) attributes {dimension_semantics = [#tpu.dimension_semantics<parallel>], iteration_bounds = array<i64: 2>, scalar_prefetch = 0 : i64, scratch_operands = 0 : i64, tpu.core_type = #tpu.core_type<tc>, window_params = [{transform_indices = @transform_0, window_bounds = array<i64: 16, 34>}, {pipeline_mode = #tpu.pipeline_mode<synchronous>, transform_indices = @transform_1, window_bounds = array<i64: 1, 16, 16>}, {pipeline_mode = #tpu.pipeline_mode<synchronous>, transform_indices = @transform_2, window_bounds = array<i64: 1, 16, 16>}, {pipeline_mode = #tpu.pipeline_mode<synchronous>, transform_indices = @transform_3, window_bounds = array<i64: 64, 32>}, {pipeline_mode = #tpu.pipeline_mode<synchronous>, transform_indices = @transform_4, window_bounds = array<i64: 2, 32>}, {pipeline_mode = #tpu.pipeline_mode<synchronous>, transform_indices = @transform_5, window_bounds = array<i64: 64, 32>}, {pipeline_mode = #tpu.pipeline_mode<synchronous>, transform_indices = @transform_6, window_bounds = array<i64: 2, 32>}, {transform_indices = @transform_7, window_bounds = array<i64: 16, 32>}]} {
    %c0 = arith.constant 0 : index
    %c0_0 = arith.constant 0 : index
    %0 = vector.load %arg1[%c0, %c0_0] : memref<16x34xbf16, #tpu.memory_space<vmem>>, vector<16x34xbf16>
    %1 = vector.extract_strided_slice %0 {offsets = [0, 0], sizes = [16, 32], strides = [1, 1]} : vector<16x34xbf16> to vector<16x32xbf16>
    %2 = vector.extract_strided_slice %0 {offsets = [0, 32], sizes = [16, 1], strides = [1, 1]} : vector<16x34xbf16> to vector<16x1xbf16>
    %3 = vector.extract_strided_slice %0 {offsets = [0, 33], sizes = [16, 1], strides = [1, 1]} : vector<16x34xbf16> to vector<16x1xbf16>
    %c0_1 = arith.constant 0 : index
    %c0_2 = arith.constant 0 : index
    %c0_3 = arith.constant 0 : index
    %4 = vector.load %arg2[%c0_1, %c0_2, %c0_3] : memref<1x16x16xbf16, #tpu.memory_space<vmem>>, vector<1x16x16xbf16>
    %c0_4 = arith.constant 0 : index
    %c0_5 = arith.constant 0 : index
    %5 = vector.load %arg4[%c0_4, %c0_5] : memref<64x32xbf16, #tpu.memory_space<vmem>>, vector<64x32xbf16>
    %c0_6 = arith.constant 0 : index
    %c0_7 = arith.constant 0 : index
    %6 = vector.load %arg5[%c0_6, %c0_7] : memref<2x32xf32, #tpu.memory_space<vmem>>, vector<2x32xf32>
    %7 = vector.broadcast %2 : vector<16x1xbf16> to vector<16x32xbf16>
    %8 = arith.mulf %7, %1 : vector<16x32xbf16>
    %9 = vector.shape_cast %1 : vector<16x32xbf16> to vector<1x16x32xbf16>
    "tpu.trace_start"() <{level = 10 : i32, message = "bjk,bkc->bjc"}> : () -> ()
    %cst = arith.constant dense<0.000000e+00> : vector<1x16x32xf32>
    %10 = tpu.matmul %4, %9, %cst {dimension_numbers = #tpu.dot_dimension_numbers<[2], [1], [1], [2], [0, 0, 0, 1, 1, 2], [0], [0]>} : vector<1x16x16xbf16>, vector<1x16x32xbf16>, vector<1x16x32xf32> -> vector<1x16x32xf32>
    "tpu.trace_stop"() : () -> ()
    %11 = vector.shape_cast %10 : vector<1x16x32xf32> to vector<16x32xf32>
    %12 = arith.truncf %11 : vector<16x32xf32> to vector<16x32xbf16>
    %13 = tpu.concatenate %8, %12 in 1 : vector<16x32xbf16>, vector<16x32xbf16> -> vector<16x64xbf16>
    %cst_8 = arith.constant dense<0.000000e+00> : vector<16x32xf32>
    %14 = tpu.matmul %13, %5, %cst_8 {dimension_numbers = #tpu.dot_dimension_numbers<[1], [0], [0], [1], [0, 0, 1, 1], [], []>} : vector<16x64xbf16>, vector<64x32xbf16>, vector<16x32xf32> -> vector<16x32xf32>
    %15 = vector.extract_strided_slice %6 {offsets = [0, 0], sizes = [1, 32], strides = [1, 1]} : vector<2x32xf32> to vector<1x32xf32>
    %16 = vector.broadcast %15 : vector<1x32xf32> to vector<16x32xf32>
    %17 = arith.mulf %14, %16 : vector<16x32xf32>
    %18 = vector.extract_strided_slice %6 {offsets = [1, 0], sizes = [1, 32], strides = [1, 1]} : vector<2x32xf32> to vector<1x32xf32>
    %19 = vector.broadcast %18 : vector<1x32xf32> to vector<16x32xf32>
    %20 = arith.addf %17, %19 : vector<16x32xf32>
    %cst_9 = arith.constant 0.000000e+00 : f32
    %21 = vector.broadcast %cst_9 : f32 to vector<16x32xf32>
    %22 = arith.maximumf %20, %21 : vector<16x32xf32>
    %23 = arith.truncf %22 : vector<16x32xf32> to vector<16x32xbf16>
    %c0_10 = arith.constant 0 : index
    %c0_11 = arith.constant 0 : index
    %c0_12 = arith.constant 0 : index
    %24 = vector.load %arg3[%c0_10, %c0_11, %c0_12] : memref<1x16x16xbf16, #tpu.memory_space<vmem>>, vector<1x16x16xbf16>
    %c0_13 = arith.constant 0 : index
    %c0_14 = arith.constant 0 : index
    %25 = vector.load %arg6[%c0_13, %c0_14] : memref<64x32xbf16, #tpu.memory_space<vmem>>, vector<64x32xbf16>
    %c0_15 = arith.constant 0 : index
    %c0_16 = arith.constant 0 : index
    %26 = vector.load %arg7[%c0_15, %c0_16] : memref<2x32xf32, #tpu.memory_space<vmem>>, vector<2x32xf32>
    %27 = vector.broadcast %3 : vector<16x1xbf16> to vector<16x32xbf16>
    %28 = arith.mulf %27, %23 : vector<16x32xbf16>
    %29 = vector.shape_cast %23 : vector<16x32xbf16> to vector<1x16x32xbf16>
    "tpu.trace_start"() <{level = 10 : i32, message = "bjk,bkc->bjc"}> : () -> ()
    %cst_17 = arith.constant dense<0.000000e+00> : vector<1x16x32xf32>
    %30 = tpu.matmul %24, %29, %cst_17 {dimension_numbers = #tpu.dot_dimension_numbers<[2], [1], [1], [2], [0, 0, 0, 1, 1, 2], [0], [0]>} : vector<1x16x16xbf16>, vector<1x16x32xbf16>, vector<1x16x32xf32> -> vector<1x16x32xf32>
    "tpu.trace_stop"() : () -> ()
    %31 = vector.shape_cast %30 : vector<1x16x32xf32> to vector<16x32xf32>
    %32 = arith.truncf %31 : vector<16x32xf32> to vector<16x32xbf16>
    %33 = tpu.concatenate %28, %32 in 1 : vector<16x32xbf16>, vector<16x32xbf16> -> vector<16x64xbf16>
    %cst_18 = arith.constant dense<0.000000e+00> : vector<16x32xf32>
    %34 = tpu.matmul %33, %25, %cst_18 {dimension_numbers = #tpu.dot_dimension_numbers<[1], [0], [0], [1], [0, 0, 1, 1], [], []>} : vector<16x64xbf16>, vector<64x32xbf16>, vector<16x32xf32> -> vector<16x32xf32>
    %35 = vector.extract_strided_slice %26 {offsets = [0, 0], sizes = [1, 32], strides = [1, 1]} : vector<2x32xf32> to vector<1x32xf32>
    %36 = vector.broadcast %35 : vector<1x32xf32> to vector<16x32xf32>
    %37 = arith.mulf %34, %36 : vector<16x32xf32>
    %38 = vector.extract_strided_slice %26 {offsets = [1, 0], sizes = [1, 32], strides = [1, 1]} : vector<2x32xf32> to vector<1x32xf32>
    %39 = vector.broadcast %38 : vector<1x32xf32> to vector<16x32xf32>
    %40 = arith.addf %37, %39 : vector<16x32xf32>
    %cst_19 = arith.constant 0.000000e+00 : f32
    %41 = vector.broadcast %cst_19 : f32 to vector<16x32xf32>
    %42 = arith.maximumf %40, %41 : vector<16x32xf32>
    %43 = arith.extf %1 : vector<16x32xbf16> to vector<16x32xf32>
    %44 = arith.addf %43, %42 : vector<16x32xf32>
    %c0_20 = arith.constant 0 : index
    %c0_21 = arith.constant 0 : index
    %45 = vector.load %arg8[%c0_20, %c0_21] : memref<16x32xf32, #tpu.memory_space<vmem>>, vector<16x32xf32>
    tpu.vector_store %arg8[%c0_20, %c0_21], %44 {strides = array<i32>} : memref<16x32xf32, #tpu.memory_space<vmem>>, vector<16x32xf32>,
    return
  }
  func.func @transform_0(%arg0: i32) -> (i32, i32) {
    %c0_i32 = arith.constant 0 : i32
    %c0_i32_0 = arith.constant 0 : i32
    return %arg0, %c0_i32 : i32, i32
  }
  func.func @transform_1(%arg0: i32) -> (i32, i32, i32) {
    %c0_i32 = arith.constant 0 : i32
    %c0_i32_0 = arith.constant 0 : i32
    %c0_i32_1 = arith.constant 0 : i32
    %c0_i32_2 = arith.constant 0 : i32
    return %c0_i32, %c0_i32_0, %c0_i32_1 : i32, i32, i32
  }
  func.func @transform_2(%arg0: i32) -> (i32, i32, i32) {
    %c0_i32 = arith.constant 0 : i32
    %c0_i32_0 = arith.constant 0 : i32
    %c0_i32_1 = arith.constant 0 : i32
    %c0_i32_2 = arith.constant 0 : i32
    return %c0_i32, %c0_i32_0, %c0_i32_1 : i32, i32, i32
  }
  func.func @transform_3(%arg0: i32) -> (i32, i32) {
    %c0_i32 = arith.constant 0 : i32
    %c0_i32_0 = arith.constant 0 : i32
    %c0_i32_1 = arith.constant 0 : i32
    return %c0_i32, %c0_i32_0 : i32, i32
  }
  func.func @transform_4(%arg0: i32) -> (i32, i32) {
    %c0_i32 = arith.constant 0 : i32
    %c0_i32_0 = arith.constant 0 : i32
    %c0_i32_1 = arith.constant 0 : i32
    return %c0_i32, %c0_i32_0 : i32, i32
  }
  func.func @transform_5(%arg0: i32) -> (i32, i32) {
    %c0_i32 = arith.constant 0 : i32
    %c0_i32_0 = arith.constant 0 : i32
    %c0_i32_1 = arith.constant 0 : i32
    return %c0_i32, %c0_i32_0 : i32, i32
  }
  func.func @transform_6(%arg0: i32) -> (i32, i32) {
    %c0_i32 = arith.constant 0 : i32
    %c0_i32_0 = arith.constant 0 : i32
    %c0_i32_1 = arith.constant 0 : i32
    return %c0_i32, %c0_i32_0 : i32, i32
  }
  func.func @transform_7(%arg0: i32) -> (i32, i32) {
    %c0_i32 = arith.constant 0 : i32
    %c0_i32_0 = arith.constant 0 : i32
    return %arg0, %c0_i32 : i32, i32
  }
}

</mosaic_0001>

<llo_original>
// kernel: tpu_custom_call.1
$region0: #{tpu_custom_call.1}
  #allocation0 [shape = 'u32[]', space=smem, size = 0x4, offset = 0x4, fixed_abs, tag = 'smem constant byte address 0x4 - core index']
  #allocation1 [shape = 'u32[144,128]{1,0:T(1,128)}', space=vmem, size = 0x12000, scoped, tag = 'internal scratch']
  %s0 = inlined_call_operand.vmem [shape: bf16[32,34], index: 0, kind: input, shape index: {}]
  %s1 = inlined_call_operand.vmem [shape: bf16[1,16,16], index: 1, kind: input, shape index: {}]
  %s2 = inlined_call_operand.vmem [shape: bf16[1,16,16], index: 2, kind: input, shape index: {}]
  %s3 = inlined_call_operand.vmem [shape: bf16[64,32], index: 3, kind: input, shape index: {}]
  %s4 = inlined_call_operand.vmem [shape: f32[2,32], index: 4, kind: input, shape index: {}]
  %s5 = inlined_call_operand.vmem [shape: bf16[64,32], index: 5, kind: input, shape index: {}]
  %s6 = inlined_call_operand.vmem [shape: f32[2,32], index: 6, kind: input, shape index: {}]
  %s7 = inlined_call_operand.hbm [shape: f32[32,32], index: 7, kind: output, shape index: {}]
  %s8 = sld [smem:[#allocation0]]
  $region61: #{tpu_custom_call.1} parent=0
    _
  %s10 = ssub.s32 1, %s8
  %s11 = scalar_select 0, %s10, %s8
  $region1: #{tpu_custom_call.1} parent=0
    #allocation2 [shape = 'u8[16384]{0}', space=vmem, size = 0x4000, scoped, tag = 'output window, operand 0']
    #allocation3 [shape = 's32[2]{0}', space=sflag, size = 0x8, scoped, tag = 'scoped memory for tpu_custom_call.1']
    %12 = vsyncpa [#allocation3], 0
    %s13 = scalar_lea.sflag [#allocation3], 1
    %14 = vsyncpa %s13, 0
    loop: start=0, step=1, limit=4
    $region2: #{tpu_custom_call.1} parent=1 // loop_pre_header
      _
    $region3: #{tpu_custom_call.1} parent=1 // loop_header
      %s16 = sphi 0, %s20
      %p17 = scmp.ge.s32.totalorder %s16, 4
      %s26 = sphi 0, %s28
      %s29 = sphi 0, %s26
      %s30 = sphi 0, %s29
      %s46 = sphi 0, %s30
      %s50 = sphi 0, %s50
      %s52 = sphi 0, %s50
      %s53 = sphi 0, %s52
      %s67 = sphi 0, %s53
      %s71 = sphi 0, %s71
      %s73 = sphi 0, %s71
      %s74 = sphi 0, %s73
      %s88 = sphi 0, %s74
      %s92 = sphi 0, %s92
      %s94 = sphi 0, %s92
      %s95 = sphi 0, %s94
      %s109 = sphi 0, %s95
      %s113 = sphi 0, %s113
      %s115 = sphi 0, %s113
      %s116 = sphi 0, %s115
      %s130 = sphi 0, %s116
      %s134 = sphi 0, %s134
      %s136 = sphi 0, %s134
      %s137 = sphi 0, %s136
      %s151 = sphi 0, %s137
      %s155 = sphi 0, %s155
      %s157 = sphi 0, %s155
      %s158 = sphi 0, %s157
      %s172 = sphi 0, %s158
      %s178 = sphi 0, %s180
      %s181 = sphi 0, %s178
      %s182 = sphi 0, %s181
      %s198 = sphi 0, %s182
    $region4: #{tpu_custom_call.1} parent=1 // loop_header_branch
      %19 = sbr.rel (%p17) target = $region8
    $region5: #{tpu_custom_call.1} parent=1 // loop_body
      %s21 = ssub.s32 %s16, 1
      %s22 = ssub.s32 %s16, 2
      %s23 = sadd.s32 %s16, 1
      %s24 = ssub.s32 %s16, %s23
      %p25 = scmp.eq.s32.totalorder %s24, 0
      %s27 = sadd.s32 %s26, 1
      %s28 = scalar_select %p25, %s26, %s27
      %p31 = pneg %p25
      %p32 = scmp.eq.s32.totalorder %s16, 1
      %p33 = por %p31, %p32
      %p34 = scmp.ne.s32.totalorder %s26, %s29
      %p35 = scmp.eq.s32.totalorder %s16, 0
      %p36 = por %p34, %p35
      %p37 = scmp.ne.s32.totalorder %s26, %s29
      %p38 = scmp.eq.s32.totalorder %s21, 1
      %p39 = por %p37, %p38
      %p40 = scmp.ne.s32.totalorder %s29, %s30
      %p41 = scmp.eq.s32.totalorder %s21, 0
      %p42 = por %p40, %p41
      %p43 = scmp.ne.s32.totalorder %s29, %s30
      %p44 = scmp.eq.s32.totalorder %s22, 1
      %p45 = por %p43, %p44
      %p47 = scmp.ne.s32.totalorder %s30, %s46
      %p48 = scmp.eq.s32.totalorder %s22, 0
      %p49 = por %p47, %p48
      %s51 = sadd.s32 %s50, 1
      %p54 = scmp.eq.s32.totalorder %s16, 1
      %p55 = scmp.ne.s32.totalorder %s50, %s52
      %p56 = scmp.eq.s32.totalorder %s16, 0
      %p57 = por %p55, %p56
      %p58 = scmp.ne.s32.totalorder %s50, %s52
      %p59 = scmp.eq.s32.totalorder %s21, 1
      %p60 = por %p58, %p59
      %p61 = scmp.ne.s32.totalorder %s52, %s53
      %p62 = scmp.eq.s32.totalorder %s21, 0
      %p63 = por %p61, %p62
      %p64 = scmp.ne.s32.totalorder %s52, %s53
      %p65 = scmp.eq.s32.totalorder %s22, 1
      %p66 = por %p64, %p65
      %p68 = scmp.ne.s32.totalorder %s53, %s67
      %p69 = scmp.eq.s32.totalorder %s22, 0
      %p70 = por %p68, %p69
      %s72 = sadd.s32 %s71, 1
      %p75 = scmp.eq.s32.totalorder %s16, 1
      %p76 = scmp.ne.s32.totalorder %s71, %s73
      %p77 = scmp.eq.s32.totalorder %s16, 0
      %p78 = por %p76, %p77
      %p79 = scmp.ne.s32.totalorder %s71, %s73
      %p80 = scmp.eq.s32.totalorder %s21, 1
      %p81 = por %p79, %p80
      %p82 = scmp.ne.s32.totalorder %s73, %s74
      %p83 = scmp.eq.s32.totalorder %s21, 0
      %p84 = por %p82, %p83
      %p85 = scmp.ne.s32.totalorder %s73, %s74
      %p86 = scmp.eq.s32.totalorder %s22, 1
      %p87 = por %p85, %p86
      %p89 = scmp.ne.s32.totalorder %s74, %s88
      %p90 = scmp.eq.s32.totalorder %s22, 0
      %p91 = por %p89, %p90
      %s93 = sadd.s32 %s92, 1
      %p96 = scmp.eq.s32.totalorder %s16, 1
      %p97 = scmp.ne.s32.totalorder %s92, %s94
      %p98 = scmp.eq.s32.totalorder %s16, 0
      %p99 = por %p97, %p98
      %p100 = scmp.ne.s32.totalorder %s92, %s94
      %p101 = scmp.eq.s32.totalorder %s21, 1
      %p102 = por %p100, %p101
      %p103 = scmp.ne.s32.totalorder %s94, %s95
      %p104 = scmp.eq.s32.totalorder %s21, 0
      %p105 = por %p103, %p104
      %p106 = scmp.ne.s32.totalorder %s94, %s95
      %p107 = scmp.eq.s32.totalorder %s22, 1
      %p108 = por %p106, %p107
      %p110 = scmp.ne.s32.totalorder %s95, %s109
      %p111 = scmp.eq.s32.totalorder %s22, 0
      %p112 = por %p110, %p111
      %s114 = sadd.s32 %s113, 1
      %p117 = scmp.eq.s32.totalorder %s16, 1
      %p118 = scmp.ne.s32.totalorder %s113, %s115
      %p119 = scmp.eq.s32.totalorder %s16, 0
      %p120 = por %p118, %p119
      %p121 = scmp.ne.s32.totalorder %s113, %s115
      %p122 = scmp.eq.s32.totalorder %s21, 1
      %p123 = por %p121, %p122
      %p124 = scmp.ne.s32.totalorder %s115, %s116
      %p125 = scmp.eq.s32.totalorder %s21, 0
      %p126 = por %p124, %p125
      %p127 = scmp.ne.s32.totalorder %s115, %s116
      %p128 = scmp.eq.s32.totalorder %s22, 1
      %p129 = por %p127, %p128
      %p131 = scmp.ne.s32.totalorder %s116, %s130
      %p132 = scmp.eq.s32.totalorder %s22, 0
      %p133 = por %p131, %p132
      %s135 = sadd.s32 %s134, 1
      %p138 = scmp.eq.s32.totalorder %s16, 1
      %p139 = scmp.ne.s32.totalorder %s134, %s136
      %p140 = scmp.eq.s32.totalorder %s16, 0
      %p141 = por %p139, %p140
      %p142 = scmp.ne.s32.totalorder %s134, %s136
      %p143 = scmp.eq.s32.totalorder %s21, 1
      %p144 = por %p142, %p143
      %p145 = scmp.ne.s32.totalorder %s136, %s137
      %p146 = scmp.eq.s32.totalorder %s21, 0
      %p147 = por %p145, %p146
      %p148 = scmp.ne.s32.totalorder %s136, %s137
      %p149 = scmp.eq.s32.totalorder %s22, 1
      %p150 = por %p148, %p149
      %p152 = scmp.ne.s32.totalorder %s137, %s151
      %p153 = scmp.eq.s32.totalorder %s22, 0
      %p154 = por %p152, %p153
      %s156 = sadd.s32 %s155, 1
      %p159 = scmp.eq.s32.totalorder %s16, 1
      %p160 = scmp.ne.s32.totalorder %s155, %s157
      %p161 = scmp.eq.s32.totalorder %s16, 0
      %p162 = por %p160, %p161
      %p163 = scmp.ne.s32.totalorder %s155, %s157
      %p164 = scmp.eq.s32.totalorder %s21, 1
      %p165 = por %p163, %p164
      %p166 = scmp.ne.s32.totalorder %s157, %s158
      %p167 = scmp.eq.s32.totalorder %s21, 0
      %p168 = por %p166, %p167
      %p169 = scmp.ne.s32.totalorder %s157, %s158
      %p170 = scmp.eq.s32.totalorder %s22, 1
      %p171 = por %p169, %p170
      %p173 = scmp.ne.s32.totalorder %s158, %s172
      %p174 = scmp.eq.s32.totalorder %s22, 0
      %p175 = por %p173, %p174
      %s176 = ssub.s32 %s16, %s23
      %p177 = scmp.eq.s32.totalorder %s176, 0
      %s179 = sadd.s32 %s178, 1
      %s180 = scalar_select %p177, %s178, %s179
      %p183 = pneg %p177
      %p184 = scmp.eq.s32.totalorder %s16, 1
      %p185 = por %p183, %p184
      %p186 = scmp.ne.s32.totalorder %s178, %s181
      %p187 = scmp.eq.s32.totalorder %s16, 0
      %p188 = por %p186, %p187
      %p189 = scmp.ne.s32.totalorder %s178, %s181
      %p190 = scmp.eq.s32.totalorder %s21, 1
      %p191 = por %p189, %p190
      %p192 = scmp.ne.s32.totalorder %s181, %s182
      %p193 = scmp.eq.s32.totalorder %s21, 0
      %p194 = por %p192, %p193
      %p195 = scmp.ne.s32.totalorder %s181, %s182
      %p196 = scmp.eq.s32.totalorder %s22, 1
      %p197 = por %p195, %p196
      %p199 = scmp.ne.s32.totalorder %s182, %s198
      %p200 = scmp.eq.s32.totalorder %s22, 0
      %p201 = por %p199, %p200
      %p202 = scmp.le.s32.totalorder 1, %s16
      %p203 = scmp.lt.s32.totalorder %s16, 3
      %p204 = pnand %p202, %p203
      %p205 = pneg %p204
      // Predicated region
      $region9: #{tpu_custom_call.1} parent=5 // pred_check
        _
      $region10: #{tpu_custom_call.1} parent=5 // pred_check_branch
        %207 = sbr.rel (%p204) target = $region12
      $region11: #{tpu_custom_call.1} parent=5 // pred_region
        %s208 = ssub.s32 %s16, 1
        // Predicated region
        $region13: #{tpu_custom_call.1} parent=11 // pred_check
          %p209 = pneg %p63
        $region14: #{tpu_custom_call.1} parent=11 // pred_check_branch
          %211 = sbr.rel (%p209) target = $region16
        $region15: #{tpu_custom_call.1} parent=11 // pred_region
          _
        $region16: #{tpu_custom_call.1} parent=11 // pred_fallthru
          _
        // Predicated region
        $region17: #{tpu_custom_call.1} parent=11 // pred_check
          %p212 = pneg %p84
        $region18: #{tpu_custom_call.1} parent=11 // pred_check_branch
          %214 = sbr.rel (%p212) target = $region20
        $region19: #{tpu_custom_call.1} parent=11 // pred_region
          _
        $region20: #{tpu_custom_call.1} parent=11 // pred_fallthru
          _
        // Predicated region
        $region21: #{tpu_custom_call.1} parent=11 // pred_check
          %p215 = pneg %p105
        $region22: #{tpu_custom_call.1} parent=11 // pred_check_branch
          %217 = sbr.rel (%p215) target = $region24
        $region23: #{tpu_custom_call.1} parent=11 // pred_region
          _
        $region24: #{tpu_custom_call.1} parent=11 // pred_fallthru
          _
        // Predicated region
        $region25: #{tpu_custom_call.1} parent=11 // pred_check
          %p218 = pneg %p126
        $region26: #{tpu_custom_call.1} parent=11 // pred_check_branch
          %220 = sbr.rel (%p218) target = $region28
        $region27: #{tpu_custom_call.1} parent=11 // pred_region
          _
        $region28: #{tpu_custom_call.1} parent=11 // pred_fallthru
          _
        // Predicated region
        $region29: #{tpu_custom_call.1} parent=11 // pred_check
          %p221 = pneg %p147
        $region30: #{tpu_custom_call.1} parent=11 // pred_check_branch
          %223 = sbr.rel (%p221) target = $region32
        $region31: #{tpu_custom_call.1} parent=11 // pred_region
          _
        $region32: #{tpu_custom_call.1} parent=11 // pred_fallthru
          _
        // Predicated region
        $region33: #{tpu_custom_call.1} parent=11 // pred_check
          %p224 = pneg %p168
        $region34: #{tpu_custom_call.1} parent=11 // pred_check_branch
          %226 = sbr.rel (%p224) target = $region36
        $region35: #{tpu_custom_call.1} parent=11 // pred_region
          _
        $region36: #{tpu_custom_call.1} parent=11 // pred_fallthru
          _
      $region12: #{tpu_custom_call.1} parent=5 // pred_fallthru
        _
      %p227 = scmp.lt.s32.totalorder %s16, 2
      // Predicated region
      $region37: #{tpu_custom_call.1} parent=5 // pred_check
        %p228 = pneg %p227
      $region38: #{tpu_custom_call.1} parent=5 // pred_check_branch
        %230 = sbr.rel (%p228) target = $region40
      $region39: #{tpu_custom_call.1} parent=5 // pred_region
        // Predicated region
        $region41: #{tpu_custom_call.1} parent=39 // pred_check
          %p231 = pneg %p36
        $region42: #{tpu_custom_call.1} parent=39 // pred_check_branch
          %233 = sbr.rel (%p231) target = $region44
        $region43: #{tpu_custom_call.1} parent=39 // pred_region
          %s234 = smul.u32 2, %s16
          %p235 = scmp.lt.s32.totalorder %s234, 3
          %s236 = scalar_select %p235, %s234, 3
          %s237 = smul.addr %s236, 4
          %s238 = scalar_lea.vmem %s0, %s237
          %s239 = smul.u32 2, %s16
        $region44: #{tpu_custom_call.1} parent=39 // pred_fallthru
          _
      $region40: #{tpu_custom_call.1} parent=5 // pred_fallthru
        _
      %p240 = scmp.le.s32.totalorder 1, %s16
      %p241 = scmp.lt.s32.totalorder %s16, 3
      %p242 = pnand %p240, %p241
      %p243 = pneg %p242
      // Predicated region
      $region45: #{tpu_custom_call.1} parent=5 // pred_check
        _
      $region46: #{tpu_custom_call.1} parent=5 // pred_check_branch
        %245 = sbr.rel (%p242) target = $region48
      $region47: #{tpu_custom_call.1} parent=5 // pred_region
        %s246 = ssub.s32 %s16, 1
        %s247 = smul.u32 2, %s21
        %p248 = scmp.lt.s32.totalorder %s247, 3
        %s249 = scalar_select %p248, %s247, 3
        %s250 = smul.addr %s249, 4
        %s251 = scalar_lea.vmem %s0, %s250
        %p252 = pneg %p42
        %p253 = pneg %p39
        %p254 = pneg %p63
        %p255 = pneg %p60
        %p256 = pneg %p84
        %p257 = pneg %p81
        %p258 = pneg %p105
        %p259 = pneg %p102
        %p260 = pneg %p126
        %p261 = pneg %p123
        %p262 = pneg %p147
        %p263 = pneg %p144
        %p264 = pneg %p168
        %p265 = pneg %p165
        %p266 = pneg %p194
        %p267 = pneg %p191
        %s268 = sand.u32 %s181, 1
        %s269 = scalar_lea.sflag [#allocation3], %s268
        %s270 = sand.u32 %s181, 1
        %s271 = smul.addr %s270, 16
        %s272 = scalar_lea.vmem [#allocation2], %s271
        %s273 = smul.u32 2, %s21
        %p274 = scmp.lt.s32.totalorder %s273, 3
        %s275 = scalar_select %p274, %s273, 3
        %s276 = smul.addr %s275, 4
        %s277 = scalar_lea.vmem %s0, %s276
        %s278 = smul.u32 2, %s21
        %s279 = smul.u32 2, %s21
        %v281 = vld [vmem:[%s277] sm:$0xf]
        %v282 = vld [vmem:[%s277 + $0x4] sm:$0xf]
        %v283 = vld [vmem:[%s1] sm:$0xf]
        %v284 = vld [vmem:[%s1 + $0x4] sm:$0xf]
        %v285 = vld [vmem:[%s3] sm:$0xf]
        %v286 = vld [vmem:[%s3 + $0x4] sm:$0xf]
        %v287 = vld [vmem:[%s3 + $0x8] sm:$0xf]
        %v288 = vld [vmem:[%s3 + $0xc] sm:$0xf]
        %v289 = vld [vmem:[%s3 + $0x10] sm:$0xf]
        %v290 = vld [vmem:[%s3 + $0x14] sm:$0xf]
        %v291 = vld [vmem:[%s3 + $0x18] sm:$0xf]
        %v292 = vld [vmem:[%s3 + $0x1c] sm:$0xf]
        %v293 = vld [vmem:[%s4] sm:$0x3]
        %295 = vset.pattern.permute.xlu0 32
        %296 = vperm.xlu0 %295, %v281
        %v297 = vpop.permute.xlu0 %296
        %v300 = vunpack.c.l.s4 839922192
        %v301 = vunpack.c.0.s8 %v300
        %v302 = vlaneseq
        %v303 = vshrl.u32 %v302, 7
        %v304 = vsub.s32 %v301, %v303
        %v305 = vrot.slane %v297, %v304
        %307 = vset.pattern.permute.xlu0 32
        %308 = vperm.xlu0 %307, %v282
        %v309 = vpop.permute.xlu0 %308
        %v312 = vunpack.c.l.s4 839922192
        %v313 = vunpack.c.0.s8 %v312
        %v314 = vlaneseq
        %v315 = vshrl.u32 %v314, 7
        %v316 = vsub.s32 %v313, %v315
        %v317 = vrot.slane %v309, %v316
        %v318 = vmul.bf16 %v305, %v281
        %v319 = vmul.bf16 %v317, %v282
        %v322 = vunpack.c.l.b16 %v283
        %v323 = vunpack.c.l.b16 %v284
        %v324 = vpack.c.b16 %v323, %v322
        %v327 = vunpack.c.l.b16 %v281
        %v328 = vunpack.c.l.b16 %v282
        %v329 = vpack.c.b16 %v328, %v327
        %vm331 = vcmask 130048
        %v333 = vsel %vm331, %v324, 0
        %335 = vmatprep.subr.bf16.mxu0 0
        %336 = vmatpush1.bf16.msra.mxu0 %v329
        %337 = vmatprep.subr.bf16.mxu0 0
        %338 = vmatpush1.bf16.msra.mxu0 0
        %339 = vmatprep.subr.bf16.mxu0 0
        %340 = vmatpush1.bf16.msra.mxu0 0
        %341 = vmatprep.subr.bf16.mxu0 0
        %342 = vmatpush1.bf16.msra.mxu0 0
        %343 = vmatprep.subr.bf16.mxu0 0
        %344 = vmatpush1.bf16.msra.mxu0 0
        %345 = vmatprep.subr.bf16.mxu0 0
        %346 = vmatpush1.bf16.msra.mxu0 0
        %347 = vmatprep.subr.bf16.mxu0 0
        %348 = vmatpush1.bf16.msra.mxu0 0
        %349 = vmatprep.subr.bf16.mxu0 0
        %350 = vmatpush1.bf16.msra.mxu0 0
        %351 = vmatprep.subr.bf16.mxu0 0
        %352 = vmatpush1.bf16.msra.mxu0 0
        %353 = vmatprep.subr.bf16.mxu0 0
        %354 = vmatpush1.bf16.msra.mxu0 0
        %355 = vmatprep.subr.bf16.mxu0 0
        %356 = vmatpush1.bf16.msra.mxu0 0
        %357 = vmatprep.subr.bf16.mxu0 0
        %358 = vmatpush1.bf16.msra.mxu0 0
        %359 = vmatprep.subr.bf16.mxu0 0
        %360 = vmatpush1.bf16.msra.mxu0 0
        %361 = vmatprep.subr.bf16.mxu0 0
        %362 = vmatpush1.bf16.msra.mxu0 0
        %363 = vmatprep.subr.bf16.mxu0 0
        %364 = vmatpush1.bf16.msra.mxu0 0
        %365 = vmatprep.subr.bf16.mxu0 0
        %366 = vmatpush1.bf16.msra.mxu0 0
        %367 = vmatprep.mubr.bf16.mxu0 0
        %368 = vmatmul.mubr.bf16.gmra.mrb[0].mxu0 %v333
        %v369 = vpop.f32.mrb[0].mxu0
        %v370 = vadd.f32 0.0, %v369
        %v371 = vpop.f32.mrb[0].mxu0
        %v372 = vpop.f32.mrb[0].mxu0
        %v373 = vadd.f32 0.0, %v372
        %v374 = vpop.f32.mrb[0].mxu0
        %375 = vdwg.mxu0
        %v376 = vpack.c.bf16 %v373, %v370
        %v379 = vunpack.c.l.b16 %v318
        %v380 = vunpack.c.l.b16 %v319
        %v381 = vpack.c.b16 %v380, %v379
        %383 = vrot.lane.b32.xlu0 %v376, 32
        %v384 = vpop.permute.xlu0 %383
        %vm385 = vcmask 261120
        %v388 = vsel %vm385, %v381, %v384
        %v397 = vunpack.c.l.b16 %v285
        %v398 = vunpack.c.l.b16 %v286
        %v399 = vunpack.c.l.b16 %v287
        %v400 = vunpack.c.l.b16 %v288
        %v401 = vunpack.c.l.b16 %v289
        %v402 = vunpack.c.l.b16 %v290
        %v403 = vunpack.c.l.b16 %v291
        %v404 = vunpack.c.l.b16 %v292
        %v405 = vpack.c.b16 %v398, %v397
        %v406 = vpack.c.b16 %v400, %v399
        %v407 = vpack.c.b16 %v402, %v401
        %v408 = vpack.c.b16 %v404, %v403
        %vm413 = vcmask 523264
        %v414 = vsel %vm413, %v388, 0
        %416 = vmatprep.subr.bf16.mxu0 0
        %417 = vmatpush1.bf16.msra.mxu0 %v405
        %418 = vmatprep.subr.bf16.mxu0 0
        %419 = vmatpush1.bf16.msra.mxu0 %v406
        %420 = vmatprep.subr.bf16.mxu0 0
        %421 = vmatpush1.bf16.msra.mxu0 %v407
        %422 = vmatprep.subr.bf16.mxu0 0
        %423 = vmatpush1.bf16.msra.mxu0 %v408
        %424 = vmatprep.subr.bf16.mxu0 0
        %425 = vmatpush1.bf16.msra.mxu0 0
        %426 = vmatprep.subr.bf16.mxu0 0
        %427 = vmatpush1.bf16.msra.mxu0 0
        %428 = vmatprep.subr.bf16.mxu0 0
        %429 = vmatpush1.bf16.msra.mxu0 0
        %430 = vmatprep.subr.bf16.mxu0 0
        %431 = vmatpush1.bf16.msra.mxu0 0
        %432 = vmatprep.subr.bf16.mxu0 0
        %433 = vmatpush1.bf16.msra.mxu0 0
        %434 = vmatprep.subr.bf16.mxu0 0
        %435 = vmatpush1.bf16.msra.mxu0 0
        %436 = vmatprep.subr.bf16.mxu0 0
        %437 = vmatpush1.bf16.msra.mxu0 0
        %438 = vmatprep.subr.bf16.mxu0 0
        %439 = vmatpush1.bf16.msra.mxu0 0
        %440 = vmatprep.subr.bf16.mxu0 0
        %441 = vmatpush1.bf16.msra.mxu0 0
        %442 = vmatprep.subr.bf16.mxu0 0
        %443 = vmatpush1.bf16.msra.mxu0 0
        %444 = vmatprep.subr.bf16.mxu0 0
        %445 = vmatpush1.bf16.msra.mxu0 0
        %446 = vmatprep.subr.bf16.mxu0 0
        %447 = vmatpush1.bf16.msra.mxu0 0
        %448 = vmatprep.mubr.bf16.mxu0 0
        %449 = vmatmul.mubr.bf16.gmra.mrb[0].mxu0 %v414
        %v450 = vpop.f32.mrb[0].mxu0
        %v451 = vadd.f32 0.0, %v450
        %v452 = vpop.f32.mrb[0].mxu0
        %v453 = vpop.f32.mrb[0].mxu0
        %v454 = vadd.f32 0.0, %v453
        %v455 = vpop.f32.mrb[0].mxu0
        %456 = vdwg.mxu0
        %v457 = vlaneseq
        %v458 = vshrl.u32 %v457, 7
        %v459 = vsub.s32 0, %v458
        %v460 = vrot.slane %v293, %v459
        %v461 = vmul.f32 %v451, %v460
        %v462 = vmul.f32 %v454, %v460
        %v463 = vlaneseq
        %v464 = vshrl.u32 %v463, 7
        %v465 = vsub.s32 1, %v464
        %v466 = vrot.slane %v293, %v465
        %v467 = vadd.f32 %v461, %v466
        %v468 = vadd.f32 %v462, %v466
        %v469 = vmax.f32 %v467, 0.0
        %v470 = vmax.f32 %v468, 0.0
        %v471 = vpack.c.bf16 %v470, %v469
        %v472 = vld [vmem:[%s2] sm:$0xf]
        %v473 = vld [vmem:[%s2 + $0x4] sm:$0xf]
        %v474 = vld [vmem:[%s5] sm:$0xf]
        %v475 = vld [vmem:[%s5 + $0x4] sm:$0xf]
        %v476 = vld [vmem:[%s5 + $0x8] sm:$0xf]
        %v477 = vld [vmem:[%s5 + $0xc] sm:$0xf]
        %v478 = vld [vmem:[%s5 + $0x10] sm:$0xf]
        %v479 = vld [vmem:[%s5 + $0x14] sm:$0xf]
        %v480 = vld [vmem:[%s5 + $0x18] sm:$0xf]
        %v481 = vld [vmem:[%s5 + $0x1c] sm:$0xf]
        %v482 = vld [vmem:[%s6] sm:$0x3]
        %483 = vset.pattern.permute.xlu0 33
        %484 = vperm.xlu0 %483, %v281
        %v485 = vpop.permute.xlu0 %484
        %v488 = vunpack.c.l.s4 839922192
        %v489 = vunpack.c.0.s8 %v488
        %v490 = vlaneseq
        %v491 = vshrl.u32 %v490, 7
        %v492 = vsub.s32 %v489, %v491
        %v493 = vrot.slane %v485, %v492
        %494 = vset.pattern.permute.xlu0 33
        %495 = vperm.xlu0 %494, %v282
        %v496 = vpop.permute.xlu0 %495
        %v499 = vunpack.c.l.s4 839922192
        %v500 = vunpack.c.0.s8 %v499
        %v501 = vlaneseq
        %v502 = vshrl.u32 %v501, 7
        %v503 = vsub.s32 %v500, %v502
        %v504 = vrot.slane %v496, %v503
        %v506 = vunpack.c.l.b16 %v471
        %v507 = vunpack.c.h.b16 %v471
        %v508 = vpack.c.b16 %v506, %v506
        %v509 = vpack.c.b16 %v507, %v507
        %v512 = vmul.bf16 %v493, %v508
        %v513 = vmul.bf16 %v504, %v509
        %v516 = vunpack.c.l.b16 %v472
        %v517 = vunpack.c.l.b16 %v473
        %v518 = vpack.c.b16 %v517, %v516
        %v520 = vsel %vm331, %v518, 0
        %522 = vmatprep.subr.bf16.mxu0 0
        %523 = vmatpush1.bf16.msra.mxu0 %v471
        %524 = vmatprep.subr.bf16.mxu0 0
        %525 = vmatpush1.bf16.msra.mxu0 0
        %526 = vmatprep.subr.bf16.mxu0 0
        %527 = vmatpush1.bf16.msra.mxu0 0
        %528 = vmatprep.subr.bf16.mxu0 0
        %529 = vmatpush1.bf16.msra.mxu0 0
        %530 = vmatprep.subr.bf16.mxu0 0
        %531 = vmatpush1.bf16.msra.mxu0 0
        %532 = vmatprep.subr.bf16.mxu0 0
        %533 = vmatpush1.bf16.msra.mxu0 0
        %534 = vmatprep.subr.bf16.mxu0 0
        %535 = vmatpush1.bf16.msra.mxu0 0
        %536 = vmatprep.subr.bf16.mxu0 0
        %537 = vmatpush1.bf16.msra.mxu0 0
        %538 = vmatprep.subr.bf16.mxu0 0
        %539 = vmatpush1.bf16.msra.mxu0 0
        %540 = vmatprep.subr.bf16.mxu0 0
        %541 = vmatpush1.bf16.msra.mxu0 0
        %542 = vmatprep.subr.bf16.mxu0 0
        %543 = vmatpush1.bf16.msra.mxu0 0
        %544 = vmatprep.subr.bf16.mxu0 0
        %545 = vmatpush1.bf16.msra.mxu0 0
        %546 = vmatprep.subr.bf16.mxu0 0
        %547 = vmatpush1.bf16.msra.mxu0 0
        %548 = vmatprep.subr.bf16.mxu0 0
        %549 = vmatpush1.bf16.msra.mxu0 0
        %550 = vmatprep.subr.bf16.mxu0 0
        %551 = vmatpush1.bf16.msra.mxu0 0
        %552 = vmatprep.subr.bf16.mxu0 0
        %553 = vmatpush1.bf16.msra.mxu0 0
        %554 = vmatprep.mubr.bf16.mxu0 0
        %555 = vmatmul.mubr.bf16.gmra.mrb[0].mxu0 %v520
        %v556 = vpop.f32.mrb[0].mxu0
        %v557 = vadd.f32 0.0, %v556
        %v558 = vpop.f32.mrb[0].mxu0
        %v559 = vpop.f32.mrb[0].mxu0
        %v560 = vadd.f32 0.0, %v559
        %v561 = vpop.f32.mrb[0].mxu0
        %562 = vdwg.mxu0
        %v563 = vpack.c.bf16 %v560, %v557
        %v566 = vunpack.c.l.b16 %v512
        %v567 = vunpack.c.l.b16 %v513
        %v568 = vpack.c.b16 %v567, %v566
        %570 = vrot.lane.b32.xlu0 %v563, 32
        %v571 = vpop.permute.xlu0 %570
        %v574 = vsel %vm385, %v568, %v571
        %v583 = vunpack.c.l.b16 %v474
        %v584 = vunpack.c.l.b16 %v475
        %v585 = vunpack.c.l.b16 %v476
        %v586 = vunpack.c.l.b16 %v477
        %v587 = vunpack.c.l.b16 %v478
        %v588 = vunpack.c.l.b16 %v479
        %v589 = vunpack.c.l.b16 %v480
        %v590 = vunpack.c.l.b16 %v481
        %v591 = vpack.c.b16 %v584, %v583
        %v592 = vpack.c.b16 %v586, %v585
        %v593 = vpack.c.b16 %v588, %v587
        %v594 = vpack.c.b16 %v590, %v589
        %v599 = vsel %vm413, %v574, 0
        %601 = vmatprep.subr.bf16.mxu0 0
        %602 = vmatpush1.bf16.msra.mxu0 %v591
        %603 = vmatprep.subr.bf16.mxu0 0
        %604 = vmatpush1.bf16.msra.mxu0 %v592
        %605 = vmatprep.subr.bf16.mxu0 0
        %606 = vmatpush1.bf16.msra.mxu0 %v593
        %607 = vmatprep.subr.bf16.mxu0 0
        %608 = vmatpush1.bf16.msra.mxu0 %v594
        %609 = vmatprep.subr.bf16.mxu0 0
        %610 = vmatpush1.bf16.msra.mxu0 0
        %611 = vmatprep.subr.bf16.mxu0 0
        %612 = vmatpush1.bf16.msra.mxu0 0
        %613 = vmatprep.subr.bf16.mxu0 0
        %614 = vmatpush1.bf16.msra.mxu0 0
        %615 = vmatprep.subr.bf16.mxu0 0
        %616 = vmatpush1.bf16.msra.mxu0 0
        %617 = vmatprep.subr.bf16.mxu0 0
        %618 = vmatpush1.bf16.msra.mxu0 0
        %619 = vmatprep.subr.bf16.mxu0 0
        %620 = vmatpush1.bf16.msra.mxu0 0
        %621 = vmatprep.subr.bf16.mxu0 0
        %622 = vmatpush1.bf16.msra.mxu0 0
        %623 = vmatprep.subr.bf16.mxu0 0
        %624 = vmatpush1.bf16.msra.mxu0 0
        %625 = vmatprep.subr.bf16.mxu0 0
        %626 = vmatpush1.bf16.msra.mxu0 0
        %627 = vmatprep.subr.bf16.mxu0 0
        %628 = vmatpush1.bf16.msra.mxu0 0
        %629 = vmatprep.subr.bf16.mxu0 0
        %630 = vmatpush1.bf16.msra.mxu0 0
        %631 = vmatprep.subr.bf16.mxu0 0
        %632 = vmatpush1.bf16.msra.mxu0 0
        %633 = vmatprep.mubr.bf16.mxu0 0
        %634 = vmatmul.mubr.bf16.gmra.mrb[0].mxu0 %v599
        %v635 = vpop.f32.mrb[0].mxu0
        %v636 = vadd.f32 0.0, %v635
        %v637 = vpop.f32.mrb[0].mxu0
        %v638 = vpop.f32.mrb[0].mxu0
        %v639 = vadd.f32 0.0, %v638
        %v640 = vpop.f32.mrb[0].mxu0
        %641 = vdwg.mxu0
        %v642 = vlaneseq
        %v643 = vshrl.u32 %v642, 7
        %v644 = vsub.s32 0, %v643
        %v645 = vrot.slane %v482, %v644
        %v646 = vmul.f32 %v636, %v645
        %v647 = vmul.f32 %v639, %v645
        %v648 = vlaneseq
        %v649 = vshrl.u32 %v648, 7
        %v650 = vsub.s32 1, %v649
        %v651 = vrot.slane %v482, %v650
        %v652 = vadd.f32 %v646, %v651
        %v653 = vadd.f32 %v647, %v651
        %v654 = vmax.f32 %v652, 0.0
        %v655 = vmax.f32 %v653, 0.0
        %v656 = vunpack.c.l.bf16 %v281
        %v657 = vunpack.c.l.bf16 %v282
        %v658 = vadd.f32 %v656, %v654
        %v659 = vadd.f32 %v657, %v655
        %660 = vst.msk [vmem:[%s272] sm:$0xff] %vm385, %v658
        %661 = vst.msk [vmem:[%s272 + $0x8] sm:$0xff] %vm385, %v659
        %s662 = sand.u32 %s181, 1
        %s663 = scalar_lea.sflag [#allocation3], %s662
        %s664 = sand.u32 %s181, 1
        %s665 = smul.addr %s664, 16
        %s666 = scalar_lea.vmem [#allocation2], %s665
        // Predicated region
        $region49: #{tpu_custom_call.1} parent=47 // pred_check
          %p667 = pneg %p191
        $region50: #{tpu_custom_call.1} parent=47 // pred_check_branch
          %669 = sbr.rel (%p667) target = $region52
        $region51: #{tpu_custom_call.1} parent=47 // pred_region
          %s670 = smul.u32 2, %s21
          %s672 = ssub.s32 256, 256
          %673 = vsyncadd %s663, %s672
          %s674 = smul.addr %s670, 128
          %s675 = scalar_lea.hbm %s7, %s674
          %s676 = sshll.u32 %s666, 4
          %s677 = int_to_ptr.vmem [resolvable:$true] %s676
          %682 = dma.vmem_to_hbm [thread:$0]  %s677, 256, %s675, %s663, 128, 128, 8
        $region52: #{tpu_custom_call.1} parent=47 // pred_fallthru
          _
      $region48: #{tpu_custom_call.1} parent=5 // pred_fallthru
        _
      %p683 = scmp.le.s32.totalorder 2, %s16
      // Predicated region
      $region53: #{tpu_custom_call.1} parent=5 // pred_check
        %p684 = pneg %p683
      $region54: #{tpu_custom_call.1} parent=5 // pred_check_branch
        %686 = sbr.rel (%p684) target = $region56
      $region55: #{tpu_custom_call.1} parent=5 // pred_region
        %s687 = ssub.s32 %s16, 2
        // Predicated region
        $region57: #{tpu_custom_call.1} parent=55 // pred_check
          %p688 = pneg %p197
        $region58: #{tpu_custom_call.1} parent=55 // pred_check_branch
          %690 = sbr.rel (%p688) target = $region60
        $region59: #{tpu_custom_call.1} parent=55 // pred_region
          %s691 = sand.u32 %s182, 1
          %s692 = scalar_lea.sflag [#allocation3], %s691
          %s693 = sand.u32 %s182, 1
          %s694 = smul.addr %s693, 16
          %s695 = scalar_lea.vmem [#allocation2], %s694
          %696 = dma.done %s692, 256
        $region60: #{tpu_custom_call.1} parent=55 // pred_fallthru
          _
      $region56: #{tpu_custom_call.1} parent=5 // pred_fallthru
        _
    $region6: #{tpu_custom_call.1} parent=1 // loop_footer
      %s20 = sadd.s32 1, %s16
    $region7: #{tpu_custom_call.1} parent=1 // loop_footer_branch
      %15 = sbr.rel target = $region3
    $region8: #{tpu_custom_call.1} parent=1 // loop_exit
      _
    %697 = vsyncpa [#allocation3], 1
    %s698 = scalar_lea.sflag [#allocation3], 1
    %699 = vsyncpa %s698, 1

</llo_original>
